<compile_context>
chip_gen: v6e
topology: v6e:2x2x1
jax: 0.10.0
libtpu: 0.0.40
codegen_flags: <defaults>
</compile_context>

<pallas_src>
import math
from functools import partial

import numpy as np
import jax
import jax.numpy as jnp
from jax import lax
from jax.experimental import pallas as pl
from jax.experimental.pallas import tpu as pltpu

EPS = 1e-5  # nn.GroupNorm default eps
_SMEM = pl.BlockSpec(memory_space=pltpu.MemorySpace.SMEM)


# ----------------------------------------------------------------- 1) fused Q/K/V projection
def _qkv_proj_kernel(x_ref, wq_ref, wk_ref, wv_ref, bq_ref, bk_ref, bv_ref,
                     q_ref, k_ref, v_ref):
    x = x_ref[...].astype(jnp.bfloat16)          # bf16 MXU operands, f32 accumulation
    q_ref[...] = (jnp.dot(x, wq_ref[...], preferred_element_type=jnp.float32)
                  + bq_ref[...]).astype(q_ref.dtype)
    k_ref[...] = (jnp.dot(x, wk_ref[...], preferred_element_type=jnp.float32)
                  + bk_ref[...]).astype(k_ref.dtype)
    v_ref[...] = (jnp.dot(x, wv_ref[...], preferred_element_type=jnp.float32)
                  + bv_ref[...]).astype(v_ref.dtype)


def _row_tile(m):
    # Fixed ladder + cdiv grid (ragged last tile is masked on store); no whole-M fallback
    # that would blow the VMEM budget at large B*S.
    for t in (512, 256, 128, 64, 32, 16, 8):
        if t <= m:
            return t
    return m


def _qkv_proj(x2d, wq, wk, wv, bq, bk, bv):
    """x2d: (M, H) f32.  Weights bf16, (H, Nq/Nk/Nv).  Returns bf16 (M, N*) activations."""
    M, H = x2d.shape
    Nq, Nk, Nv = wq.shape[1], wk.shape[1], wv.shape[1]
    tm = _row_tile(M)
    row_block = lambda n: pl.BlockSpec((tm, n), lambda i: (i, 0))
    full_block = lambda r, c: pl.BlockSpec((r, c), lambda i: (0, 0))
    return pl.pallas_call(
        _qkv_proj_kernel,
        out_shape=(jax.ShapeDtypeStruct((M, Nq), jnp.bfloat16),
                   jax.ShapeDtypeStruct((M, Nk), jnp.bfloat16),
                   jax.ShapeDtypeStruct((M, Nv), jnp.bfloat16)),
        grid=(pl.cdiv(M, tm),),
        in_specs=[row_block(H),
                  full_block(H, Nq), full_block(H, Nk), full_block(H, Nv),   # resident weights
                  full_block(1, Nq), full_block(1, Nk), full_block(1, Nv)],  # resident biases
        out_specs=(row_block(Nq), row_block(Nk), row_block(Nv)),
        compiler_params=pltpu.CompilerParams(
            dimension_semantics=("parallel",),
            # raise the scoped-VMEM default (16 MiB on v5e) so the resident bf16 weights +
            # double-buffered row tiles fit; 32 MiB is safe on v5e/v6e/v7x at these sizes.
            vmem_limit_bytes=32 * 1024 * 1024),
    )(x2d, wq, wk, wv, bq.reshape(1, Nq), bk.reshape(1, Nk), bv.reshape(1, Nv))


# ------------------------------------------------------- 2) differential attention (per batch)
def _softmax_lastdim(s):
    m = jnp.max(s, axis=-1, keepdims=True)
    e = jnp.exp(s - m)
    # divide -> EUP approximate reciprocal (keeps the VALU slot free)
    return e * pl.reciprocal(jnp.sum(e, axis=-1, keepdims=True), approx=True)


def _diff_attn_kernel(lam_ref, q_ref, k_ref, v_ref, o_ref, *, num_heads, num_hidden,
                      inv_sqrt_dk):
    H = num_hidden
    lam = lam_ref[0]
    dn = (((1,), (1,)), ((), ()))                # (S,H) x (S,H) contracted on H -> (S,S)
    head_out = []
    for h in range(num_heads):                   # static unroll: NH is small
        qh = q_ref[h]                            # (S, 2H) bf16; halves sliced in VMEM (free-ish)
        kh = k_ref[h]
        vh = v_ref[h]                            # (S, H) bf16
        q1, q2 = qh[:, :H], qh[:, H:]
        k1, k2 = kh[:, :H], kh[:, H:]
        if inv_sqrt_dk != 1.0:                   # pre-scale q; skipped entirely for d_k == 1
            scl = jnp.asarray(inv_sqrt_dk, q1.dtype)
            q1, q2 = q1 * scl, q2 * scl
        s1 = lax.dot_general(q1, k1, dn, preferred_element_type=jnp.float32)
        s2 = lax.dot_general(q2, k2, dn, preferred_element_type=jnp.float32)
        attn = _softmax_lastdim(s1) - lam * _softmax_lastdim(s2)
        # TODO(synk): nn.Dropout(0.1) on the scores is a stochastic training-time op; identity here.
        head_out.append(jnp.dot(attn.astype(jnp.bfloat16), vh,
                                preferred_element_type=jnp.float32))
    # Lane-concat of per-head (S, H) blocks == torch's transpose(1,2).contiguous() buffer:
    # row s, cols [h*H:(h+1)*H] = attention_output[b, h, s, :].  One 128-lane-dense store.
    o_ref[...] = jnp.concatenate(head_out, axis=-1).astype(o_ref.dtype)


def _diff_attention(q4, k4, v4, lam, d_k):
    B, NH, S, H = v4.shape
    kernel = partial(_diff_attn_kernel, num_heads=NH, num_hidden=H,
                     inv_sqrt_dk=1.0 / math.sqrt(float(d_k)))
    batch_block = lambda d: pl.BlockSpec((None, NH, S, d), lambda b: (b, 0, 0, 0))
    return pl.pallas_call(
        kernel,
        out_shape=jax.ShapeDtypeStruct((B * S, NH * H), jnp.float32),
        grid=(B,),
        in_specs=[_SMEM, batch_block(2 * H), batch_block(2 * H), batch_block(H)],
        out_specs=pl.BlockSpec((S, NH * H), lambda b: (b, 0)),
        compiler_params=pltpu.CompilerParams(dimension_semantics=("parallel",)),
    )(lam, q4, k4, v4)


# ----------------------------------- 3) GroupNorm * (1 - lambda) + head concat + W_o (fused)
def _gn_wo_kernel(lam_ref, gamma_ref, beta_ref, x_ref, wo_ref, bo_ref, o_ref, *, eps):
    one_m_lam = 1.0 - lam_ref[0]
    num_groups = x_ref.shape[0]
    cols = []
    for g in range(num_groups):                  # static unroll over the NH groups
        xg = x_ref[g]                            # (S, H) f32 == torch-view slice [b, g, :, :]
        mu = jnp.mean(xg)
        var = jnp.mean(xg * xg) - mu * mu        # single-pass moments
        yg = (xg - mu) * lax.rsqrt(var + eps)
        # (1 - lambda) folded into the per-group affine
        cols.append(yg * (gamma_ref[g] * one_m_lam) + beta_ref[g] * one_m_lam)
    # torch: cat([out[:, g] for g], dim=-1)  ==  lane-concat of the per-group blocks
    wo_in = jnp.concatenate(cols, axis=-1).astype(jnp.bfloat16)       # (S, NH*H)
    o_ref[...] = (jnp.dot(wo_in, wo_ref[...], preferred_element_type=jnp.float32)
                  + bo_ref[...]).astype(o_ref.dtype)


def _groupnorm_wo(view4, gamma, beta, lam, wo, bo, eps=EPS):
    B, NH, S, H = view4.shape
    NHH = NH * H
    return pl.pallas_call(
        partial(_gn_wo_kernel, eps=eps),
        out_shape=jax.ShapeDtypeStruct((B * S, H), jnp.float32),
        grid=(B,),
        in_specs=[_SMEM, _SMEM, _SMEM,
                  pl.BlockSpec((None, NH, S, H), lambda b: (b, 0, 0, 0)),
                  pl.BlockSpec((NHH, H), lambda b: (0, 0)),   # W_o resident in VMEM
                  pl.BlockSpec((1, H), lambda b: (0, 0))],    # bias resident
        out_specs=pl.BlockSpec((S, H), lambda b: (b, 0)),
        compiler_params=pltpu.CompilerParams(dimension_semantics=("parallel",)),
    )(lam, gamma, beta, view4, wo, bo.reshape(1, H))


# ---------------------------------------------------------------------------- full forward pass
def multi_head_attention(x, wq, bq, wk, bk, wv, bv, wo, bo, gamma, beta, lam, d_k=1):
    """Eval-mode forward of MultiHeadAttention (mask=None).

    x: (B, S, H).  Weights pre-transposed to (in, out): wq/wk: (H, 2*NH*H), wv: (H, NH*H),
    wo: (NH*H, H).  gamma/beta: (NH,) GroupNorm affine.  lam: (1,) the torch.rand(1) lambda.
    Assumes S is a multiple of 8 (sublane tiling of the (B*S, .) intermediates).
    """
    B, S, H = x.shape
    NH = wv.shape[1] // H

    # bf16 weights once per call: halves weight DMA + resident VMEM; MXU accumulates in f32.
    wq_b, wk_b, wv_b, wo_b = (w.astype(jnp.bfloat16) for w in (wq, wk, wv, wo))

    # 1) fused Q/K/V projection
    q2d, k2d, v2d = _qkv_proj(x.reshape(B * S, H), wq_b, wk_b, wv_b, bq, bk, bv)

    # torch .view(-1, NH, S, 2H) / (-1, NH, S, H): free reshapes of the contiguous buffers.
    q4 = q2d.reshape(B, NH, S, 2 * H)
    k4 = k2d.reshape(B, NH, S, 2 * H)
    v4 = v2d.reshape(B, NH, S, H)

    # 2) differential attention; output already in torch's transpose(1,2).contiguous() layout.
    buf = _diff_attention(q4, k4, v4, lam, d_k)          # (B*S, NH*H)

    # torch .view(-1, NH, S, H) of that contiguous buffer: free reshape (no data movement).
    view4 = buf.reshape(B, NH, S, H)

    # 3) GroupNorm + (1-lambda) + head concat + W_o in one kernel.
    out2d = _groupnorm_wo(view4, gamma, beta, lam, wo_b, bo)   # (B*S, H)
    return out2d.reshape(B, S, H)


# -------------------------------------------------------------------------------- pure-JAX ref
def _reference(x, wq, bq, wk, bk, wv, bv, wo, bo, gamma, beta, lam, d_k=1, eps=EPS):
    B, S, H = x.shape
    NH = wv.shape[1] // H
    q = (x @ wq + bq).reshape(B, NH, S, 2 * H)
    k = (x @ wk + bk).reshape(B, NH, S, 2 * H)
    v = (x @ wv + bv).reshape(B, NH, S, H)
    q1, q2 = q[..., :H], q[..., H:]
    k1, k2 = k[..., :H], k[..., H:]
    scale = 1.0 / math.sqrt(float(d_k))
    s1 = jnp.einsum("bhqd,bhkd->bhqk", q1, k1) * scale
    s2 = jnp.einsum("bhqd,bhkd->bhqk", q2, k2) * scale
    attn = jax.nn.softmax(s1, axis=-1) - lam * jax.nn.softmax(s2, axis=-1)
    o = jnp.einsum("bhqk,bhkd->bhqd", attn, v)
    o = jnp.transpose(o, (0, 2, 1, 3)).reshape(B, NH, S, H)
    mean = o.mean(axis=(2, 3), keepdims=True)
    var = jnp.square(o - mean).mean(axis=(2, 3), keepdims=True)
    o = (o - mean) / jnp.sqrt(var + eps)
    o = o * gamma[None, :, None, None] + beta[None, :, None, None]
    o = o * (1.0 - lam)
    o = jnp.transpose(o, (0, 2, 1, 3)).reshape(B, S, NH * H)
    return o @ wo + bo


if __name__ == "__main__":
    key = jax.random.PRNGKey(0)
    ks = jax.random.split(key, 12)

    B, S, H, NH = 2, 8, 32, 4      # batch, seq_len, num_hidden, num_heads
    d_k = 1                        # module default

    x = jax.random.normal(ks[0], (B, S, H), dtype=jnp.float32)
    wq = jax.random.normal(ks[1], (H, 2 * NH * H), dtype=jnp.float32) * 0.05
    bq = jax.random.normal(ks[2], (2 * NH * H,), dtype=jnp.float32) * 0.05
    wk = jax.random.normal(ks[3], (H, 2 * NH * H), dtype=jnp.float32) * 0.05
    bk = jax.random.normal(ks[4], (2 * NH * H,), dtype=jnp.float32) * 0.05
    wv = jax.random.normal(ks[5], (H, NH * H), dtype=jnp.float32) * 0.05
    bv = jax.random.normal(ks[6], (NH * H,), dtype=jnp.float32) * 0.05
    wo = jax.random.normal(ks[7], (NH * H, H), dtype=jnp.float32) * 0.05
    bo = jax.random.normal(ks[8], (H,), dtype=jnp.float32) * 0.05
    gamma = 1.0 + 0.1 * jax.random.normal(ks[9], (NH,), dtype=jnp.float32)
    beta = 0.1 * jax.random.normal(ks[10], (NH,), dtype=jnp.float32)
    lam = jax.random.uniform(ks[11], (1,), dtype=jnp.float32)   # stand-in for torch.rand(1)

    out = multi_head_attention(x, wq, bq, wk, bk, wv, bv, wo, bo, gamma, beta, lam, d_k=d_k)
    out = jax.block_until_ready(out)

    ref = _reference(x, wq, bq, wk, bk, wv, bv, wo, bo, gamma, beta, lam, d_k=d_k)
    assert out.shape == (B, S, H)
    # Tolerance relaxed vs the pure-f32 version: matmul operands are bf16 (per perf feedback)
    # and GroupNorm amplifies absolute errors by 1/std of the group.
    np.testing.assert_allclose(np.asarray(out), np.asarray(ref), rtol=5e-2, atol=3e-2)
    print("KERNEL_OK")
</pallas_src>

<mosaic_0001>
module attributes {stable_mosaic.version = 11 : i64} {
  func.func @_qkv_proj_kernel(%arg0: i32, %arg1: memref<16x32xf32, #tpu.memory_space<vmem>>, %arg2: memref<32x256xbf16, #tpu.memory_space<vmem>>, %arg3: memref<32x256xbf16, #tpu.memory_space<vmem>>, %arg4: memref<32x128xbf16, #tpu.memory_space<vmem>>, %arg5: memref<1x256xf32, #tpu.memory_space<vmem>>, %arg6: memref<1x256xf32, #tpu.memory_space<vmem>>, %arg7: memref<1x128xf32, #tpu.memory_space<vmem>>, %arg8: memref<16x256xbf16, #tpu.memory_space<vmem>>, %arg9: memref<16x256xbf16, #tpu.memory_space<vmem>>, %arg10: memref<16x128xbf16, #tpu.memory_space<vmem>>) attributes {dimension_semantics = [#tpu.dimension_semantics<parallel>], iteration_bounds = array<i64: 1>, scalar_prefetch = 0 : i64, scratch_operands = 0 : i64, tpu.core_type = #tpu.core_type<tc>, window_params = [{transform_indices = @transform_0, window_bounds = array<i64: 16, 32>}, {pipeline_mode = #tpu.pipeline_mode<synchronous>, transform_indices = @transform_1, window_bounds = array<i64: 32, 256>}, {pipeline_mode = #tpu.pipeline_mode<synchronous>, transform_indices = @transform_2, window_bounds = array<i64: 32, 256>}, {pipeline_mode = #tpu.pipeline_mode<synchronous>, transform_indices = @transform_3, window_bounds = array<i64: 32, 128>}, {pipeline_mode = #tpu.pipeline_mode<synchronous>, transform_indices = @transform_4, window_bounds = array<i64: 1, 256>}, {pipeline_mode = #tpu.pipeline_mode<synchronous>, transform_indices = @transform_5, window_bounds = array<i64: 1, 256>}, {pipeline_mode = #tpu.pipeline_mode<synchronous>, transform_indices = @transform_6, window_bounds = array<i64: 1, 128>}, {transform_indices = @transform_7, window_bounds = array<i64: 16, 256>}, {transform_indices = @transform_8, window_bounds = array<i64: 16, 256>}, {transform_indices = @transform_9, window_bounds = array<i64: 16, 128>}]} {
    %c0 = arith.constant 0 : index
    %c0_0 = arith.constant 0 : index
    %0 = vector.load %arg1[%c0, %c0_0] : memref<16x32xf32, #tpu.memory_space<vmem>>, vector<16x32xf32>
    %1 = arith.truncf %0 : vector<16x32xf32> to vector<16x32xbf16>
    %c0_1 = arith.constant 0 : index
    %c0_2 = arith.constant 0 : index
    %2 = vector.load %arg2[%c0_1, %c0_2] : memref<32x256xbf16, #tpu.memory_space<vmem>>, vector<32x256xbf16>
    %cst = arith.constant dense<0.000000e+00> : vector<16x256xf32>
    %3 = tpu.matmul %1, %2, %cst {dimension_numbers = #tpu.dot_dimension_numbers<[1], [0], [0], [1], [0, 0, 1, 1], [], []>} : vector<16x32xbf16>, vector<32x256xbf16>, vector<16x256xf32> -> vector<16x256xf32>
    %c0_3 = arith.constant 0 : index
    %c0_4 = arith.constant 0 : index
    %4 = vector.load %arg5[%c0_3, %c0_4] : memref<1x256xf32, #tpu.memory_space<vmem>>, vector<1x256xf32>
    %5 = vector.broadcast %4 : vector<1x256xf32> to vector<16x256xf32>
    %6 = arith.addf %3, %5 : vector<16x256xf32>
    %7 = arith.truncf %6 : vector<16x256xf32> to vector<16x256xbf16>
    %c0_5 = arith.constant 0 : index
    %c0_6 = arith.constant 0 : index
    %8 = vector.load %arg8[%c0_5, %c0_6] : memref<16x256xbf16, #tpu.memory_space<vmem>>, vector<16x256xbf16>
    tpu.vector_store %arg8[%c0_5, %c0_6], %7 {strides = array<i32>} : memref<16x256xbf16, #tpu.memory_space<vmem>>, vector<16x256xbf16>,
    %c0_7 = arith.constant 0 : index
    %c0_8 = arith.constant 0 : index
    %9 = vector.load %arg3[%c0_7, %c0_8] : memref<32x256xbf16, #tpu.memory_space<vmem>>, vector<32x256xbf16>
    %cst_9 = arith.constant dense<0.000000e+00> : vector<16x256xf32>
    %10 = tpu.matmul %1, %9, %cst_9 {dimension_numbers = #tpu.dot_dimension_numbers<[1], [0], [0], [1], [0, 0, 1, 1], [], []>} : vector<16x32xbf16>, vector<32x256xbf16>, vector<16x256xf32> -> vector<16x256xf32>
    %c0_10 = arith.constant 0 : index
    %c0_11 = arith.constant 0 : index
    %11 = vector.load %arg6[%c0_10, %c0_11] : memref<1x256xf32, #tpu.memory_space<vmem>>, vector<1x256xf32>
    %12 = vector.broadcast %11 : vector<1x256xf32> to vector<16x256xf32>
    %13 = arith.addf %10, %12 : vector<16x256xf32>
    %14 = arith.truncf %13 : vector<16x256xf32> to vector<16x256xbf16>
    %c0_12 = arith.constant 0 : index
    %c0_13 = arith.constant 0 : index
    %15 = vector.load %arg9[%c0_12, %c0_13] : memref<16x256xbf16, #tpu.memory_space<vmem>>, vector<16x256xbf16>
    tpu.vector_store %arg9[%c0_12, %c0_13], %14 {strides = array<i32>} : memref<16x256xbf16, #tpu.memory_space<vmem>>, vector<16x256xbf16>,
    %c0_14 = arith.constant 0 : index
    %c0_15 = arith.constant 0 : index
    %16 = vector.load %arg4[%c0_14, %c0_15] : memref<32x128xbf16, #tpu.memory_space<vmem>>, vector<32x128xbf16>
    %cst_16 = arith.constant dense<0.000000e+00> : vector<16x128xf32>
    %17 = tpu.matmul %1, %16, %cst_16 {dimension_numbers = #tpu.dot_dimension_numbers<[1], [0], [0], [1], [0, 0, 1, 1], [], []>} : vector<16x32xbf16>, vector<32x128xbf16>, vector<16x128xf32> -> vector<16x128xf32>
    %c0_17 = arith.constant 0 : index
    %c0_18 = arith.constant 0 : index
    %18 = vector.load %arg7[%c0_17, %c0_18] : memref<1x128xf32, #tpu.memory_space<vmem>>, vector<1x128xf32>
    %19 = vector.broadcast %18 : vector<1x128xf32> to vector<16x128xf32>
    %20 = arith.addf %17, %19 : vector<16x128xf32>
    %21 = arith.truncf %20 : vector<16x128xf32> to vector<16x128xbf16>
    %c0_19 = arith.constant 0 : index
    %c0_20 = arith.constant 0 : index
    %22 = vector.load %arg10[%c0_19, %c0_20] : memref<16x128xbf16, #tpu.memory_space<vmem>>, vector<16x128xbf16>
    tpu.vector_store %arg10[%c0_19, %c0_20], %21 {strides = array<i32>} : memref<16x128xbf16, #tpu.memory_space<vmem>>, vector<16x128xbf16>,
    return
  }
  func.func @transform_0(%arg0: i32) -> (i32, i32) {
    %c0_i32 = arith.constant 0 : i32
    %c0_i32_0 = arith.constant 0 : i32
    return %arg0, %c0_i32 : i32, i32
  }
  func.func @transform_1(%arg0: i32) -> (i32, i32) {
    %c0_i32 = arith.constant 0 : i32
    %c0_i32_0 = arith.constant 0 : i32
    %c0_i32_1 = arith.constant 0 : i32
    return %c0_i32, %c0_i32_0 : i32, i32
  }
  func.func @transform_2(%arg0: i32) -> (i32, i32) {
    %c0_i32 = arith.constant 0 : i32
    %c0_i32_0 = arith.constant 0 : i32
    %c0_i32_1 = arith.constant 0 : i32
    return %c0_i32, %c0_i32_0 : i32, i32
  }
  func.func @transform_3(%arg0: i32) -> (i32, i32) {
    %c0_i32 = arith.constant 0 : i32
    %c0_i32_0 = arith.constant 0 : i32
    %c0_i32_1 = arith.constant 0 : i32
    return %c0_i32, %c0_i32_0 : i32, i32
  }
  func.func @transform_4(%arg0: i32) -> (i32, i32) {
    %c0_i32 = arith.constant 0 : i32
    %c0_i32_0 = arith.constant 0 : i32
    %c0_i32_1 = arith.constant 0 : i32
    return %c0_i32, %c0_i32_0 : i32, i32
  }
  func.func @transform_5(%arg0: i32) -> (i32, i32) {
    %c0_i32 = arith.constant 0 : i32
    %c0_i32_0 = arith.constant 0 : i32
    %c0_i32_1 = arith.constant 0 : i32
    return %c0_i32, %c0_i32_0 : i32, i32
  }
  func.func @transform_6(%arg0: i32) -> (i32, i32) {
    %c0_i32 = arith.constant 0 : i32
    %c0_i32_0 = arith.constant 0 : i32
    %c0_i32_1 = arith.constant 0 : i32
    return %c0_i32, %c0_i32_0 : i32, i32
  }
  func.func @transform_7(%arg0: i32) -> (i32, i32) {
    %c0_i32 = arith.constant 0 : i32
    %c0_i32_0 = arith.constant 0 : i32
    return %arg0, %c0_i32 : i32, i32
  }
  func.func @transform_8(%arg0: i32) -> (i32, i32) {
    %c0_i32 = arith.constant 0 : i32
    %c0_i32_0 = arith.constant 0 : i32
    return %arg0, %c0_i32 : i32, i32
  }
  func.func @transform_9(%arg0: i32) -> (i32, i32) {
    %c0_i32 = arith.constant 0 : i32
    %c0_i32_0 = arith.constant 0 : i32
    return %arg0, %c0_i32 : i32, i32
  }
}

</mosaic_0001>

<llo_original>
// kernel: tpu_custom_call.1
$region0: #{tpu_custom_call.1}
  #allocation0 [shape = 'u32[]', space=smem, size = 0x4, offset = 0x4, fixed_abs, tag = 'smem constant byte address 0x4 - core index']
  #allocation1 [shape = 'u32[144,128]{1,0:T(1,128)}', space=vmem, size = 0x12000, scoped, tag = 'internal scratch']
  %s0 = inlined_call_operand.hbm [shape: f32[16,32], index: 0, kind: input, shape index: {}]
  %s1 = inlined_call_operand.hbm [shape: bf16[32,256], index: 1, kind: input, shape index: {}]
  %s2 = inlined_call_operand.hbm [shape: bf16[32,256], index: 2, kind: input, shape index: {}]
  %s3 = inlined_call_operand.hbm [shape: bf16[32,128], index: 3, kind: input, shape index: {}]
  %s4 = inlined_call_operand.vmem [shape: f32[1,256], index: 4, kind: input, shape index: {}]
  %s5 = inlined_call_operand.vmem [shape: f32[1,256], index: 5, kind: input, shape index: {}]
  %s6 = inlined_call_operand.vmem [shape: f32[1,128], index: 6, kind: input, shape index: {}]
  %s7 = inlined_call_operand.hbm [shape: bf16[16,256], index: 7, kind: output, shape index: {0}]
  %s8 = inlined_call_operand.hbm [shape: bf16[16,256], index: 8, kind: output, shape index: {1}]
  %s9 = inlined_call_operand.hbm [shape: bf16[16,128], index: 9, kind: output, shape index: {2}]
  %10 = xla_tuple %s7, %s8, %s9
  %s11 = sld [smem:[#allocation0]]
  $region70: #{tpu_custom_call.1} parent=0
    _
  %s13 = ssub.s32 1, %s11
  %s14 = scalar_select 0, %s13, %s11
  $region1: #{tpu_custom_call.1} parent=0
    #allocation2 [shape = 'u8[8192]{0}', space=vmem, size = 0x2000, scoped, tag = 'input window, operand 0, single buffered']
    #allocation3 [shape = 's32[1]{0}', space=sflag, size = 0x4, scoped, tag = 'scoped memory for tpu_custom_call.1']
    #allocation4 [shape = 's32[1]{0}', space=sflag, size = 0x4, scoped, tag = 'scoped memory for tpu_custom_call.1']
    #allocation5 [shape = 'u8[16384]{0}', space=vmem, size = 0x4000, scoped, tag = 'input window, operand 1, single buffered']
    #allocation6 [shape = 's32[1]{0}', space=sflag, size = 0x4, scoped, tag = 'scoped memory for tpu_custom_call.1']
    #allocation7 [shape = 'u8[16384]{0}', space=vmem, size = 0x4000, scoped, tag = 'input window, operand 2, single buffered']
    #allocation8 [shape = 'u8[8192]{0}', space=vmem, size = 0x2000, scoped, tag = 'input window, operand 3, single buffered']
    #allocation9 [shape = 's32[1]{0}', space=sflag, size = 0x4, scoped, tag = 'scoped memory for tpu_custom_call.1']
    #allocation10 [shape = 'u8[8192]{0}', space=vmem, size = 0x2000, scoped, tag = 'output window, operand 0, single buffered']
    #allocation11 [shape = 'u8[8192]{0}', space=vmem, size = 0x2000, scoped, tag = 'output window, operand 1, single buffered']
    #allocation12 [shape = 's32[1]{0}', space=sflag, size = 0x4, scoped, tag = 'scoped memory for tpu_custom_call.1']
    #allocation13 [shape = 'u8[4096]{0}', space=vmem, size = 0x1000, scoped, tag = 'output window, operand 2, single buffered']
    %15 = vsyncpa [#allocation3], 0
    %16 = vsyncpa [#allocation6], 0
    %17 = vsyncpa [#allocation9], 0
    %18 = vsyncpa [#allocation4], 0
    %19 = vsyncpa [#allocation12], 0
    // Predicated region
    $region2: #{tpu_custom_call.1} parent=1 // pred_check
      _
    $region3: #{tpu_custom_call.1} parent=1 // pred_check_branch
      %21 = sbr.rel (0) target = $region5
    $region4: #{tpu_custom_call.1} parent=1 // pred_region
      %s23 = ssub.s32 256, 256
      %24 = vsyncadd [#allocation3], %s23
      %s25 = sshll.u32 [#allocation2], 4
      %s26 = int_to_ptr.vmem [resolvable:$true] %s25
      %31 = dma.hbm_to_vmem [thread:$0]  %s0, 256, %s26, [#allocation3], 128, 128, 8
    $region5: #{tpu_custom_call.1} parent=1 // pred_fallthru
      _
    // Predicated region
    $region6: #{tpu_custom_call.1} parent=1 // pred_check
      _
    $region7: #{tpu_custom_call.1} parent=1 // pred_check_branch
      %33 = sbr.rel (0) target = $region9
    $region8: #{tpu_custom_call.1} parent=1 // pred_region
      %s35 = ssub.s32 512, 512
      %36 = vsyncadd [#allocation6], %s35
      %s37 = sshll.u32 [#allocation5], 4
      %s38 = int_to_ptr.vmem [resolvable:$true] %s37
      %43 = dma.hbm_to_vmem [thread:$0]  %s1, 512, %s38, [#allocation6], 128, 128, 8
    $region9: #{tpu_custom_call.1} parent=1 // pred_fallthru
      _
    // Predicated region
    $region10: #{tpu_custom_call.1} parent=1 // pred_check
      _
    $region11: #{tpu_custom_call.1} parent=1 // pred_check_branch
      %45 = sbr.rel (0) target = $region13
    $region12: #{tpu_custom_call.1} parent=1 // pred_region
      %s47 = ssub.s32 512, 512
      %48 = vsyncadd [#allocation6], %s47
      %s49 = sshll.u32 [#allocation7], 4
      %s50 = int_to_ptr.vmem [resolvable:$true] %s49
      %55 = dma.hbm_to_vmem [thread:$0]  %s2, 512, %s50, [#allocation6], 128, 128, 8
    $region13: #{tpu_custom_call.1} parent=1 // pred_fallthru
      _
    // Predicated region
    $region14: #{tpu_custom_call.1} parent=1 // pred_check
      _
    $region15: #{tpu_custom_call.1} parent=1 // pred_check_branch
      %57 = sbr.rel (0) target = $region17
    $region16: #{tpu_custom_call.1} parent=1 // pred_region
      %s59 = ssub.s32 256, 256
      %60 = vsyncadd [#allocation9], %s59
      %s61 = sshll.u32 [#allocation8], 4
      %s62 = int_to_ptr.vmem [resolvable:$true] %s61
      %67 = dma.hbm_to_vmem [thread:$0]  %s3, 256, %s62, [#allocation9], 64, 64, 4
    $region17: #{tpu_custom_call.1} parent=1 // pred_fallthru
      _
    // Predicated region
    $region18: #{tpu_custom_call.1} parent=1 // pred_check
      _
    $region19: #{tpu_custom_call.1} parent=1 // pred_check_branch
      %69 = sbr.rel (0) target = $region21
    $region20: #{tpu_custom_call.1} parent=1 // pred_region
      _
    $region21: #{tpu_custom_call.1} parent=1 // pred_fallthru
      _
    // Predicated region
    $region22: #{tpu_custom_call.1} parent=1 // pred_check
      _
    $region23: #{tpu_custom_call.1} parent=1 // pred_check_branch
      %71 = sbr.rel (0) target = $region25
    $region24: #{tpu_custom_call.1} parent=1 // pred_region
      _
    $region25: #{tpu_custom_call.1} parent=1 // pred_fallthru
      _
    // Predicated region
    $region26: #{tpu_custom_call.1} parent=1 // pred_check
      _
    $region27: #{tpu_custom_call.1} parent=1 // pred_check_branch
      %73 = sbr.rel (0) target = $region29
    $region28: #{tpu_custom_call.1} parent=1 // pred_region
      _
    $region29: #{tpu_custom_call.1} parent=1 // pred_fallthru
      _
    // Predicated region
    $region30: #{tpu_custom_call.1} parent=1 // pred_check
      _
    $region31: #{tpu_custom_call.1} parent=1 // pred_check_branch
      %75 = sbr.rel (0) target = $region33
    $region32: #{tpu_custom_call.1} parent=1 // pred_region
      %76 = dma.done [#allocation3], 256
    $region33: #{tpu_custom_call.1} parent=1 // pred_fallthru
      _
    // Predicated region
    $region34: #{tpu_custom_call.1} parent=1 // pred_check
      _
    $region35: #{tpu_custom_call.1} parent=1 // pred_check_branch
      %78 = sbr.rel (0) target = $region37
    $region36: #{tpu_custom_call.1} parent=1 // pred_region
      %79 = dma.done [#allocation6], 512
    $region37: #{tpu_custom_call.1} parent=1 // pred_fallthru
      _
    // Predicated region
    $region38: #{tpu_custom_call.1} parent=1 // pred_check
      _
    $region39: #{tpu_custom_call.1} parent=1 // pred_check_branch
      %81 = sbr.rel (0) target = $region41
    $region40: #{tpu_custom_call.1} parent=1 // pred_region
      %82 = dma.done [#allocation6], 512
    $region41: #{tpu_custom_call.1} parent=1 // pred_fallthru
      _
    // Predicated region
    $region42: #{tpu_custom_call.1} parent=1 // pred_check
      _
    $region43: #{tpu_custom_call.1} parent=1 // pred_check_branch
      %84 = sbr.rel (0) target = $region45
    $region44: #{tpu_custom_call.1} parent=1 // pred_region
      %85 = dma.done [#allocation9], 256
    $region45: #{tpu_custom_call.1} parent=1 // pred_fallthru
      _
    %v87 = vld [vmem:[#allocation2] sm:$0xff]
    %v88 = vld [vmem:[#allocation2 + $0x8] sm:$0xff]
    %v89 = vpack.c.bf16 %v88, %v87
    %v90 = vld [vmem:[#allocation5] sm:$0xff]
    %v91 = vld [vmem:[#allocation5 + $0x8] sm:$0xff]
    %v92 = vld [vmem:[#allocation5 + $0x10] sm:$0xff]
    %v93 = vld [vmem:[#allocation5 + $0x18] sm:$0xff]
    %v94 = vld [vmem:[%s4] sm:$0x3]
    %v96 = vlaneseq
    %v97 = vshrl.u32 %v96, 7
    %v98 = vsub.s32 0, %v97
    %v99 = vrot.slane %v94, %v98
    %v100 = vlaneseq
    %v101 = vshrl.u32 %v100, 7
    %v102 = vsub.s32 1, %v101
    %v103 = vrot.slane %v94, %v102
    %v110 = vunpack.c.l.b16 %v90
    %v111 = vunpack.c.h.b16 %v90
    %v112 = vunpack.c.l.b16 %v91
    %v113 = vunpack.c.h.b16 %v91
    %v114 = vunpack.c.l.b16 %v92
    %v115 = vunpack.c.h.b16 %v92
    %v116 = vunpack.c.l.b16 %v93
    %v117 = vunpack.c.h.b16 %v93
    %v118 = vpack.c.b16 %v112, %v110
    %v119 = vpack.c.b16 %v113, %v111
    %v120 = vpack.c.b16 %v116, %v114
    %v121 = vpack.c.b16 %v117, %v115
    %vm126 = vcmask 261120
    %v128 = vsel %vm126, %v89, 0
    %130 = vmatprep.subr.bf16.mxu0 0
    %131 = vmatpush1.bf16.msra.mxu0 0
    %132 = vmatprep.subr.bf16.mxu0 0
    %133 = vmatpush1.bf16.msra.mxu0 0
    %134 = vmatprep.subr.bf16.mxu0 0
    %135 = vmatpush1.bf16.msra.mxu0 0
    %136 = vmatprep.subr.bf16.mxu0 0
    %137 = vmatpush1.bf16.msra.mxu0 0
    %138 = vmatprep.subr.bf16.mxu0 0
    %139 = vmatpush1.bf16.msra.mxu0 0
    %140 = vmatprep.subr.bf16.mxu0 0
    %141 = vmatpush1.bf16.msra.mxu0 0
    %142 = vmatprep.subr.bf16.mxu0 %v121
    %143 = vmatpush1.bf16.msra.mxu0 %v120
    %144 = vmatprep.subr.bf16.mxu0 %v119
    %145 = vmatpush1.bf16.msra.mxu0 %v118
    %146 = vmatprep.subr.bf16.mxu0 0
    %147 = vmatpush2.bf16.msra.mxu0 0
    %148 = vmatprep.subr.bf16.mxu0 0
    %149 = vmatpush2.bf16.msra.mxu0 0
    %150 = vmatprep.subr.bf16.mxu0 0
    %151 = vmatpush2.bf16.msra.mxu0 0
    %152 = vmatprep.subr.bf16.mxu0 0
    %153 = vmatpush2.bf16.msra.mxu0 0
    %154 = vmatprep.subr.bf16.mxu0 0
    %155 = vmatpush2.bf16.msra.mxu0 0
    %156 = vmatprep.subr.bf16.mxu0 0
    %157 = vmatpush2.bf16.msra.mxu0 0
    %158 = vmatprep.subr.bf16.mxu0 0
    %159 = vmatpush2.bf16.msra.mxu0 0
    %160 = vmatprep.subr.bf16.mxu0 0
    %161 = vmatpush2.bf16.msra.mxu0 0
    %162 = vmatprep.mubr.bf16.mxu0 0
    %163 = vmatmul.mubr.bf16.gmra.mxu0 %v128
    %v164 = vpop.f32.mrf.mxu0
    %v165 = vadd.f32 %v99, %v164
    %v166 = vpop.f32.mrf.mxu0
    %v167 = vadd.f32 %v103, %v166
    %v168 = vpop.f32.mrf.mxu0
    %v169 = vadd.f32 %v99, %v168
    %v170 = vpop.f32.mrf.mxu0
    %v171 = vadd.f32 %v103, %v170
    %172 = vdwg.mxu0
    %v173 = vpack.c.bf16 %v169, %v165
    %v174 = vpack.c.bf16 %v171, %v167
    %v177 = vunpack.c.l.b16 %v173
    %v178 = vunpack.c.l.b16 %v174
    %v179 = vunpack.c.h.b16 %v173
    %v180 = vunpack.c.h.b16 %v174
    %v181 = vpack.c.b16 %v178, %v177
    %v182 = vpack.c.b16 %v180, %v179
    %185 = vst [vmem:[#allocation10] sm:$0xff] %v181
    %186 = vst [vmem:[#allocation10 + $0x8] sm:$0xff] %v182
    %v187 = vld [vmem:[#allocation7] sm:$0xff]
    %v188 = vld [vmem:[#allocation7 + $0x8] sm:$0xff]
    %v189 = vld [vmem:[#allocation7 + $0x10] sm:$0xff]
    %v190 = vld [vmem:[#allocation7 + $0x18] sm:$0xff]
    %v191 = vld [vmem:[%s5] sm:$0x3]
    %v193 = vlaneseq
    %v194 = vshrl.u32 %v193, 7
    %v195 = vsub.s32 0, %v194
    %v196 = vrot.slane %v191, %v195
    %v197 = vlaneseq
    %v198 = vshrl.u32 %v197, 7
    %v199 = vsub.s32 1, %v198
    %v200 = vrot.slane %v191, %v199
    %v207 = vunpack.c.l.b16 %v187
    %v208 = vunpack.c.h.b16 %v187
    %v209 = vunpack.c.l.b16 %v188
    %v210 = vunpack.c.h.b16 %v188
    %v211 = vunpack.c.l.b16 %v189
    %v212 = vunpack.c.h.b16 %v189
    %v213 = vunpack.c.l.b16 %v190
    %v214 = vunpack.c.h.b16 %v190
    %v215 = vpack.c.b16 %v209, %v207
    %v216 = vpack.c.b16 %v210, %v208
    %v217 = vpack.c.b16 %v213, %v211
    %v218 = vpack.c.b16 %v214, %v212
    %223 = vmatprep.subr.bf16.mxu0 0
    %224 = vmatpush1.bf16.msra.mxu0 0
    %225 = vmatprep.subr.bf16.mxu0 0
    %226 = vmatpush1.bf16.msra.mxu0 0
    %227 = vmatprep.subr.bf16.mxu0 0
    %228 = vmatpush1.bf16.msra.mxu0 0
    %229 = vmatprep.subr.bf16.mxu0 0
    %230 = vmatpush1.bf16.msra.mxu0 0
    %231 = vmatprep.subr.bf16.mxu0 0
    %232 = vmatpush1.bf16.msra.mxu0 0
    %233 = vmatprep.subr.bf16.mxu0 0
    %234 = vmatpush1.bf16.msra.mxu0 0
    %235 = vmatprep.subr.bf16.mxu0 %v218
    %236 = vmatpush1.bf16.msra.mxu0 %v217
    %237 = vmatprep.subr.bf16.mxu0 %v216
    %238 = vmatpush1.bf16.msra.mxu0 %v215
    %239 = vmatprep.subr.bf16.mxu0 0
    %240 = vmatpush2.bf16.msra.mxu0 0
    %241 = vmatprep.subr.bf16.mxu0 0
    %242 = vmatpush2.bf16.msra.mxu0 0
    %243 = vmatprep.subr.bf16.mxu0 0
    %244 = vmatpush2.bf16.msra.mxu0 0
    %245 = vmatprep.subr.bf16.mxu0 0
    %246 = vmatpush2.bf16.msra.mxu0 0
    %247 = vmatprep.subr.bf16.mxu0 0
    %248 = vmatpush2.bf16.msra.mxu0 0
    %249 = vmatprep.subr.bf16.mxu0 0
    %250 = vmatpush2.bf16.msra.mxu0 0
    %251 = vmatprep.subr.bf16.mxu0 0
    %252 = vmatpush2.bf16.msra.mxu0 0
    %253 = vmatprep.subr.bf16.mxu0 0
    %254 = vmatpush2.bf16.msra.mxu0 0
    %255 = vmatprep.mubr.bf16.mxu0 0
    %256 = vmatmul.mubr.bf16.gmra.mxu0 %v128
    %v257 = vpop.f32.mrf.mxu0
    %v258 = vadd.f32 %v196, %v257
    %v259 = vpop.f32.mrf.mxu0
    %v260 = vadd.f32 %v200, %v259
    %v261 = vpop.f32.mrf.mxu0
    %v262 = vadd.f32 %v196, %v261
    %v263 = vpop.f32.mrf.mxu0
    %v264 = vadd.f32 %v200, %v263
    %265 = vdwg.mxu0
    %v266 = vpack.c.bf16 %v262, %v258
    %v267 = vpack.c.bf16 %v264, %v260
    %v270 = vunpack.c.l.b16 %v266
    %v271 = vunpack.c.l.b16 %v267
    %v272 = vunpack.c.h.b16 %v266
    %v273 = vunpack.c.h.b16 %v267
    %v274 = vpack.c.b16 %v271, %v270
    %v275 = vpack.c.b16 %v273, %v272
    %278 = vst [vmem:[#allocation11] sm:$0xff] %v274
    %279 = vst [vmem:[#allocation11 + $0x8] sm:$0xff] %v275
    %v280 = vld [vmem:[#allocation8] sm:$0xf]
    %v281 = vld [vmem:[#allocation8 + $0x4] sm:$0xf]
    %v282 = vld [vmem:[#allocation8 + $0x8] sm:$0xf]
    %v283 = vld [vmem:[#allocation8 + $0xc] sm:$0xf]
    %v284 = vld [vmem:[%s6] sm:$0x1]
    %v286 = vlaneseq
    %v287 = vshrl.u32 %v286, 7
    %v288 = vsub.s32 0, %v287
    %v289 = vrot.slane %v284, %v288
    %v295 = vunpack.c.l.b16 %v280
    %v296 = vunpack.c.l.b16 %v281
    %v297 = vunpack.c.l.b16 %v282
    %v298 = vunpack.c.l.b16 %v283
    %v299 = vpack.c.b16 %v296, %v295
    %v300 = vpack.c.b16 %v298, %v297
    %303 = vmatprep.subr.bf16.mxu0 0
    %304 = vmatpush1.bf16.msra.mxu0 0
    %305 = vmatprep.subr.bf16.mxu0 0
    %306 = vmatpush1.bf16.msra.mxu0 0
    %307 = vmatprep.subr.bf16.mxu0 0
    %308 = vmatpush1.bf16.msra.mxu0 0
    %309 = vmatprep.subr.bf16.mxu0 0
    %310 = vmatpush1.bf16.msra.mxu0 0
    %311 = vmatprep.subr.bf16.mxu0 0
    %312 = vmatpush1.bf16.msra.mxu0 0
    %313 = vmatprep.subr.bf16.mxu0 0
    %314 = vmatpush1.bf16.msra.mxu0 0
    %315 = vmatprep.subr.bf16.mxu0 0
    %316 = vmatpush1.bf16.msra.mxu0 %v300
    %317 = vmatprep.subr.bf16.mxu0 0
    %318 = vmatpush1.bf16.msra.mxu0 %v299
    %319 = vmatprep.subr.bf16.mxu0 0
    %320 = vmatpush2.bf16.msra.mxu0 0
    %321 = vmatprep.subr.bf16.mxu0 0
    %322 = vmatpush2.bf16.msra.mxu0 0
    %323 = vmatprep.subr.bf16.mxu0 0
    %324 = vmatpush2.bf16.msra.mxu0 0
    %325 = vmatprep.subr.bf16.mxu0 0
    %326 = vmatpush2.bf16.msra.mxu0 0
    %327 = vmatprep.subr.bf16.mxu0 0
    %328 = vmatpush2.bf16.msra.mxu0 0
    %329 = vmatprep.subr.bf16.mxu0 0
    %330 = vmatpush2.bf16.msra.mxu0 0
    %331 = vmatprep.subr.bf16.mxu0 0
    %332 = vmatpush2.bf16.msra.mxu0 0
    %333 = vmatprep.subr.bf16.mxu0 0
    %334 = vmatpush2.bf16.msra.mxu0 0
    %335 = vmatprep.mubr.bf16.mxu0 0
    %336 = vmatmul.mubr.bf16.gmra.mxu0 %v128
    %v337 = vpop.f32.mrf.mxu0
    %v338 = vadd.f32 %v289, %v337
    %v339 = vpop.f32.mrf.mxu0
    %v340 = vpop.f32.mrf.mxu0
    %v341 = vadd.f32 %v289, %v340
    %v342 = vpop.f32.mrf.mxu0
    %343 = vdwg.mxu0
    %v344 = vpack.c.bf16 %v341, %v338
    %v346 = vunpack.c.l.b16 %v344
    %v347 = vunpack.c.h.b16 %v344
    %v348 = vpack.c.b16 %v346, %v346
    %v349 = vpack.c.b16 %v347, %v347
    %352 = vst [vmem:[#allocation13] sm:$0xf] %v348
    %353 = vst [vmem:[#allocation13 + $0x4] sm:$0xf] %v349
    // Predicated region
    $region46: #{tpu_custom_call.1} parent=1 // pred_check
      _
    $region47: #{tpu_custom_call.1} parent=1 // pred_check_branch
      %355 = sbr.rel (0) target = $region49
    $region48: #{tpu_custom_call.1} parent=1 // pred_region
      %s357 = ssub.s32 256, 256
      %358 = vsyncadd [#allocation4], %s357
      %s359 = sshll.u32 [#allocation10], 4
      %s360 = int_to_ptr.vmem [resolvable:$true] %s359
      %365 = dma.vmem_to_hbm [thread:$0]  %s360, 256, %s7, [#allocation4], 128, 128, 8
    $region49: #{tpu_custom_call.1} parent=1 // pred_fallthru
      _
    // Predicated region
    $region50: #{tpu_custom_call.1} parent=1 // pred_check
      _
    $region51: #{tpu_custom_call.1} parent=1 // pred_check_branch
      %367 = sbr.rel (0) target = $region53
    $region52: #{tpu_custom_call.1} parent=1 // pred_region
      %s369 = ssub.s32 256, 256
      %370 = vsyncadd [#allocation12], %s369
      %s371 = sshll.u32 [#allocation11], 4
      %s372 = int_to_ptr.vmem [resolvable:$true] %s371
      %377 = dma.vmem_to_hbm [thread:$0]  %s372, 256, %s8, [#allocation12], 128, 128, 8
    $region53: #{tpu_custom_call.1} parent=1 // pred_fallthru
      _
    // Predicated region
    $region54: #{tpu_custom_call.1} parent=1 // pred_check
      _
    $region55: #{tpu_custom_call.1} parent=1 // pred_check_branch
      %379 = sbr.rel (0) target = $region57
    $region56: #{tpu_custom_call.1} parent=1 // pred_region
      %s381 = ssub.s32 128, 128
      %382 = vsyncadd [#allocation12], %s381
      %s383 = sshll.u32 [#allocation13], 4
      %s384 = int_to_ptr.vmem [resolvable:$true] %s383
      %389 = dma.vmem_to_hbm [thread:$0]  %s384, 128, %s9, [#allocation12], 64, 64, 4
    $region57: #{tpu_custom_call.1} parent=1 // pred_fallthru
      _
    // Predicated region
    $region58: #{tpu_custom_call.1} parent=1 // pred_check
      _
    $region59: #{tpu_custom_call.1} parent=1 // pred_check_branch
      %391 = sbr.rel (0) target = $region61
    $region60: #{tpu_custom_call.1} parent=1 // pred_region
      %392 = dma.done [#allocation4], 256
    $region61: #{tpu_custom_call.1} parent=1 // pred_fallthru
      _
    // Predicated region
    $region62: #{tpu_custom_call.1} parent=1 // pred_check
      _
    $region63: #{tpu_custom_call.1} parent=1 // pred_check_branch
      %394 = sbr.rel (0) target = $region65
    $region64: #{tpu_custom_call.1} parent=1 // pred_region
      %395 = dma.done [#allocation12], 256
    $region65: #{tpu_custom_call.1} parent=1 // pred_fallthru
      _
    // Predicated region
    $region66: #{tpu_custom_call.1} parent=1 // pred_check
      _
    $region67: #{tpu_custom_call.1} parent=1 // pred_check_branch
      %397 = sbr.rel (0) target = $region69
    $region68: #{tpu_custom_call.1} parent=1 // pred_region
      %398 = dma.done [#allocation12], 128
    $region69: #{tpu_custom_call.1} parent=1 // pred_fallthru
      _
    %399 = vsyncpa [#allocation3], 1
    %400 = vsyncpa [#allocation6], 1
    %401 = vsyncpa [#allocation9], 1
    %402 = vsyncpa [#allocation4], 1
    %403 = vsyncpa [#allocation12], 1

</llo_original>
